<compile_context>
chip_gen: v5e
topology: v5e:2x2
jax: 0.10.0
libtpu: 0.0.40
codegen_flags: <defaults>
</compile_context>

<pallas_src>
import jax
import jax.numpy as jnp
import numpy as np
from jax.experimental import pallas as pl
from jax.experimental.pallas import tpu as pltpu

TAU = 0.3
NEG = -1.0e9  # bias padding for class lanes beyond num_class: keeps padded
              # lanes out of every softmax / argmax without extra masking.


def _calm_kernel(z_ref, w_ref, b_ref, uvt_ref, qs_ref, qf_ref, lbl_ref):
    n_view, B, _ = z_ref.shape
    Cp = w_ref.shape[-1]                               # padded num_class (mult of 128)

    # ---- CaF fusion weights: softmax(u_v / tau) over the view axis, ONCE ----
    # uvt is (B, V): the view axis sits on lanes, so this is a lane reduction.
    uvt = uvt_ref[...] * (1.0 / TAU)                   # (B, V)
    m = jnp.max(uvt, axis=-1, keepdims=True)
    e = jnp.exp(uvt - m)
    wmat = e / jnp.sum(e, axis=-1, keepdims=True)      # (B, V)

    qf_acc = jnp.zeros((B, Cp), jnp.float32)
    logp_acc = jnp.zeros((B, Cp), jnp.float32)

    # V is tiny and static -> fully unrolled; accumulators stay in vregs.
    for v in range(n_view):
        z = z_ref[v]                                   # (B, D)
        w = w_ref[v]                                   # (D, Cp)
        b = b_ref[v]                                   # (1, Cp)

        # per-view linear classifier: q = z @ W + b
        q = jnp.dot(z, w, preferred_element_type=jnp.float32) + b   # (B, Cp) f32
        qs_ref[v] = q.astype(qs_ref.dtype)

        # recompute_label evidence in log-space:
        #   sum_v log softmax(q_v)  ==  argmax-equivalent to prod_v softmax(q_v)
        # (padded lanes have q = NEG -> exp(.)=0, so the log-sum-exp over real
        #  classes is exact and padded lanes accumulate huge negatives.)
        q_max = jnp.max(q, axis=-1, keepdims=True)
        shifted = q - q_max
        lse = jnp.log(jnp.sum(jnp.exp(shifted), axis=-1, keepdims=True))
        logp_acc = logp_acc + (shifted - lse)

        # CaF fusion: weighted sum of per-view logits (static column slice).
        qf_acc = qf_acc + wmat[:, v:v + 1] * q

    qf_ref[...] = qf_acc.astype(qf_ref.dtype)

    # argmax with first-index tie-break (matches torch.argmax); padded lanes
    # can never win because their accumulated evidence is ~ n_view * NEG.
    maxv = jnp.max(logp_acc, axis=-1, keepdims=True)
    iota = jax.lax.broadcasted_iota(jnp.int32, logp_acc.shape, 1)
    lbl_ref[...] = jnp.min(jnp.where(logp_acc >= maxv, iota, Cp),
                           axis=-1, keepdims=True)


def calm_forward(zs, Ws, bs, u_v):
    """zs: (V,B,D) f32, Ws: (V,D,C) f32, bs: (V,C) f32, u_v: (V,B) f32.
    Returns (qs (V,B,C), q_f (B,C), labels (B,) int32)."""
    V, B, D = zs.shape
    C = Ws.shape[-1]
    Cp = ((C + 127) // 128) * 128                      # lane-dense class dim

    # zero-pad weights, NEG-pad biases for the padded class lanes.
    W_pad = jnp.pad(Ws, ((0, 0), (0, 0), (0, Cp - C)))
    b_pad = jnp.pad(bs, ((0, 0), (0, Cp - C)), constant_values=NEG)[:, None, :]
    uvt = jnp.transpose(u_v)                           # (B, V): view softmax = lane reduce

    # Single invocation, no grid: whole arrays land in VMEM (tiny working set).
    # NOTE: for production sizes, tile B with grid=(B//tb,) marked "parallel"
    # (mandatory for v7x's 2 TCs) and keep the per-view loop inside the body.
    qs_p, qf_p, lbl = pl.pallas_call(
        _calm_kernel,
        out_shape=(
            jax.ShapeDtypeStruct((V, B, Cp), jnp.float32),
            jax.ShapeDtypeStruct((B, Cp), jnp.float32),
            jax.ShapeDtypeStruct((B, 1), jnp.int32),
        ),
    )(zs, W_pad, b_pad, uvt)

    return qs_p[..., :C], qf_p[:, :C], lbl[:, 0]


def _reference(zs, Ws, bs, u_v):
    qs = jnp.einsum("vbd,vdc->vbc", zs, Ws) + bs[:, None, :]
    p = jax.nn.softmax(qs, axis=-1)
    labels = jnp.argmax(jnp.prod(p, axis=0), axis=1)
    uuv = jax.nn.softmax(u_v / TAU, axis=0)[..., None]
    q_f = jnp.sum(uuv * qs, axis=0)
    return qs, q_f, labels.astype(jnp.int32)


if __name__ == "__main__":
    V, B, D, C = 3, 8, 32, 10   # views, batch, per-view output_dim, num_class

    key = jax.random.PRNGKey(0)
    kz, kw, kb, ku = jax.random.split(key, 4)

    # zs would be MultiViewBackbone(xs); backbone not provided -> direct input.
    zs = jax.random.normal(kz, (V, B, D), dtype=jnp.float32)
    # PyTorch nn.Linear init: U(-1/sqrt(in), 1/sqrt(in))
    bound = 1.0 / np.sqrt(D)
    Ws = jax.random.uniform(kw, (V, D, C), jnp.float32, -bound, bound)
    bs = jax.random.uniform(kb, (V, C), jnp.float32, -bound, bound)
    # u_v would be MultiClassCaE.pdf(qs, label); class not provided -> input.
    u_v = jax.random.normal(ku, (V, B), dtype=jnp.float32)

    qs, q_f, labels = jax.block_until_ready(calm_forward(zs, Ws, bs, u_v))

    qs_r, q_f_r, labels_r = _reference(zs, Ws, bs, u_v)
    np.testing.assert_allclose(np.asarray(qs), np.asarray(qs_r), atol=1e-5, rtol=1e-5)
    np.testing.assert_allclose(np.asarray(q_f), np.asarray(q_f_r), atol=1e-5, rtol=1e-5)
    np.testing.assert_array_equal(np.asarray(labels), np.asarray(labels_r))

    print("KERNEL_OK")
</pallas_src>

<mosaic_0001>
module attributes {stable_mosaic.version = 11 : i64} {
  func.func @_calm_kernel(%arg0: memref<3x8x32xf32, #tpu.memory_space<vmem>>, %arg1: memref<3x32x128xf32, #tpu.memory_space<vmem>>, %arg2: memref<3x1x128xf32, #tpu.memory_space<vmem>>, %arg3: memref<8x3xf32, #tpu.memory_space<vmem>>, %arg4: memref<3x8x128xf32, #tpu.memory_space<vmem>>, %arg5: memref<8x128xf32, #tpu.memory_space<vmem>>, %arg6: memref<8x1xi32, #tpu.memory_space<vmem>>) attributes {dimension_semantics = [], scalar_prefetch = 0 : i64, scratch_operands = 0 : i64, tpu.core_type = #tpu.core_type<tc>} {
    %c0 = arith.constant 0 : index
    %c0_0 = arith.constant 0 : index
    %0 = vector.load %arg3[%c0, %c0_0] : memref<8x3xf32, #tpu.memory_space<vmem>>, vector<8x3xf32>
    %cst = arith.constant 3.33333325 : f32
    %1 = vector.broadcast %cst : f32 to vector<8x3xf32>
    %2 = arith.mulf %0, %1 : vector<8x3xf32>
    %cst_1 = arith.constant dense<0xFF800000> : vector<8xf32>
    %3 = vector.multi_reduction <maximumf>, %2, %cst_1 [1] : vector<8x3xf32> to vector<8xf32>
    %4 = vector.shape_cast %3 : vector<8xf32> to vector<8x1xf32>
    %5 = vector.broadcast %4 : vector<8x1xf32> to vector<8x3xf32>
    %6 = arith.subf %2, %5 : vector<8x3xf32>
    %7 = math.exp %6 : vector<8x3xf32>
    %cst_2 = arith.constant dense<0.000000e+00> : vector<8xf32>
    %8 = vector.multi_reduction <add>, %7, %cst_2 [1] : vector<8x3xf32> to vector<8xf32>
    %9 = vector.shape_cast %8 : vector<8xf32> to vector<8x1xf32>
    %10 = vector.broadcast %9 : vector<8x1xf32> to vector<8x3xf32>
    %11 = arith.divf %7, %10 : vector<8x3xf32>
    %cst_3 = arith.constant 0.000000e+00 : f32
    %12 = vector.broadcast %cst_3 : f32 to vector<8x128xf32>
    %cst_4 = arith.constant 0.000000e+00 : f32
    %13 = vector.broadcast %cst_4 : f32 to vector<8x128xf32>
    %c0_5 = arith.constant 0 : index
    %c0_6 = arith.constant 0 : index
    %c0_7 = arith.constant 0 : index
    %14 = vector.load %arg0[%c0_5, %c0_6, %c0_7] : memref<3x8x32xf32, #tpu.memory_space<vmem>>, vector<1x8x32xf32>
    %15 = vector.shape_cast %14 : vector<1x8x32xf32> to vector<8x32xf32>
    %c0_8 = arith.constant 0 : index
    %c0_9 = arith.constant 0 : index
    %c0_10 = arith.constant 0 : index
    %16 = vector.load %arg1[%c0_8, %c0_9, %c0_10] : memref<3x32x128xf32, #tpu.memory_space<vmem>>, vector<1x32x128xf32>
    %17 = vector.shape_cast %16 : vector<1x32x128xf32> to vector<32x128xf32>
    %c0_11 = arith.constant 0 : index
    %c0_12 = arith.constant 0 : index
    %c0_13 = arith.constant 0 : index
    %18 = vector.load %arg2[%c0_11, %c0_12, %c0_13] : memref<3x1x128xf32, #tpu.memory_space<vmem>>, vector<1x1x128xf32>
    %19 = vector.shape_cast %18 : vector<1x1x128xf32> to vector<1x128xf32>
    %cst_14 = arith.constant dense<0.000000e+00> : vector<8x128xf32>
    %20 = tpu.matmul %15, %17, %cst_14 {dimension_numbers = #tpu.dot_dimension_numbers<[1], [0], [0], [1], [0, 0, 1, 1], [], []>} : vector<8x32xf32>, vector<32x128xf32>, vector<8x128xf32> -> vector<8x128xf32>
    %21 = vector.broadcast %19 : vector<1x128xf32> to vector<8x128xf32>
    %22 = arith.addf %20, %21 : vector<8x128xf32>
    %c0_15 = arith.constant 0 : index
    %c0_16 = arith.constant 0 : index
    %c0_17 = arith.constant 0 : index
    %23 = vector.load %arg4[%c0_15, %c0_16, %c0_17] : memref<3x8x128xf32, #tpu.memory_space<vmem>>, vector<1x8x128xf32>
    %24 = vector.shape_cast %23 : vector<1x8x128xf32> to vector<8x128xf32>
    %25 = vector.shape_cast %22 : vector<8x128xf32> to vector<1x8x128xf32>
    tpu.vector_store %arg4[%c0_15, %c0_16, %c0_17], %25 {strides = array<i32>} : memref<3x8x128xf32, #tpu.memory_space<vmem>>, vector<1x8x128xf32>,
    %cst_18 = arith.constant dense<0xFF800000> : vector<8xf32>
    %26 = vector.multi_reduction <maximumf>, %22, %cst_18 [1] : vector<8x128xf32> to vector<8xf32>
    %27 = vector.shape_cast %26 : vector<8xf32> to vector<8x1xf32>
    %28 = vector.broadcast %27 : vector<8x1xf32> to vector<8x128xf32>
    %29 = arith.subf %22, %28 : vector<8x128xf32>
    %30 = math.exp %29 : vector<8x128xf32>
    %cst_19 = arith.constant dense<0.000000e+00> : vector<8xf32>
    %31 = vector.multi_reduction <add>, %30, %cst_19 [1] : vector<8x128xf32> to vector<8xf32>
    %32 = vector.shape_cast %31 : vector<8xf32> to vector<8x1xf32>
    %33 = math.log %32 : vector<8x1xf32>
    %34 = vector.broadcast %33 : vector<8x1xf32> to vector<8x128xf32>
    %35 = arith.subf %29, %34 : vector<8x128xf32>
    %36 = arith.addf %13, %35 : vector<8x128xf32>
    %37 = vector.extract_strided_slice %11 {offsets = [0, 0], sizes = [8, 1], strides = [1, 1]} : vector<8x3xf32> to vector<8x1xf32>
    %38 = vector.broadcast %37 : vector<8x1xf32> to vector<8x128xf32>
    %39 = arith.mulf %38, %22 : vector<8x128xf32>
    %40 = arith.addf %12, %39 : vector<8x128xf32>
    %c1 = arith.constant 1 : index
    %c0_20 = arith.constant 0 : index
    %c0_21 = arith.constant 0 : index
    %41 = vector.load %arg0[%c1, %c0_20, %c0_21] : memref<3x8x32xf32, #tpu.memory_space<vmem>>, vector<1x8x32xf32>
    %42 = vector.shape_cast %41 : vector<1x8x32xf32> to vector<8x32xf32>
    %c1_22 = arith.constant 1 : index
    %c0_23 = arith.constant 0 : index
    %c0_24 = arith.constant 0 : index
    %43 = vector.load %arg1[%c1_22, %c0_23, %c0_24] : memref<3x32x128xf32, #tpu.memory_space<vmem>>, vector<1x32x128xf32>
    %44 = vector.shape_cast %43 : vector<1x32x128xf32> to vector<32x128xf32>
    %c1_25 = arith.constant 1 : index
    %c0_26 = arith.constant 0 : index
    %c0_27 = arith.constant 0 : index
    %45 = vector.load %arg2[%c1_25, %c0_26, %c0_27] : memref<3x1x128xf32, #tpu.memory_space<vmem>>, vector<1x1x128xf32>
    %46 = vector.shape_cast %45 : vector<1x1x128xf32> to vector<1x128xf32>
    %cst_28 = arith.constant dense<0.000000e+00> : vector<8x128xf32>
    %47 = tpu.matmul %42, %44, %cst_28 {dimension_numbers = #tpu.dot_dimension_numbers<[1], [0], [0], [1], [0, 0, 1, 1], [], []>} : vector<8x32xf32>, vector<32x128xf32>, vector<8x128xf32> -> vector<8x128xf32>
    %48 = vector.broadcast %46 : vector<1x128xf32> to vector<8x128xf32>
    %49 = arith.addf %47, %48 : vector<8x128xf32>
    %c1_29 = arith.constant 1 : index
    %c0_30 = arith.constant 0 : index
    %c0_31 = arith.constant 0 : index
    %50 = vector.load %arg4[%c1_29, %c0_30, %c0_31] : memref<3x8x128xf32, #tpu.memory_space<vmem>>, vector<1x8x128xf32>
    %51 = vector.shape_cast %50 : vector<1x8x128xf32> to vector<8x128xf32>
    %52 = vector.shape_cast %49 : vector<8x128xf32> to vector<1x8x128xf32>
    tpu.vector_store %arg4[%c1_29, %c0_30, %c0_31], %52 {strides = array<i32>} : memref<3x8x128xf32, #tpu.memory_space<vmem>>, vector<1x8x128xf32>,
    %cst_32 = arith.constant dense<0xFF800000> : vector<8xf32>
    %53 = vector.multi_reduction <maximumf>, %49, %cst_32 [1] : vector<8x128xf32> to vector<8xf32>
    %54 = vector.shape_cast %53 : vector<8xf32> to vector<8x1xf32>
    %55 = vector.broadcast %54 : vector<8x1xf32> to vector<8x128xf32>
    %56 = arith.subf %49, %55 : vector<8x128xf32>
    %57 = math.exp %56 : vector<8x128xf32>
    %cst_33 = arith.constant dense<0.000000e+00> : vector<8xf32>
    %58 = vector.multi_reduction <add>, %57, %cst_33 [1] : vector<8x128xf32> to vector<8xf32>
    %59 = vector.shape_cast %58 : vector<8xf32> to vector<8x1xf32>
    %60 = math.log %59 : vector<8x1xf32>
    %61 = vector.broadcast %60 : vector<8x1xf32> to vector<8x128xf32>
    %62 = arith.subf %56, %61 : vector<8x128xf32>
    %63 = arith.addf %36, %62 : vector<8x128xf32>
    %64 = vector.extract_strided_slice %11 {offsets = [0, 1], sizes = [8, 1], strides = [1, 1]} : vector<8x3xf32> to vector<8x1xf32>
    %65 = vector.broadcast %64 : vector<8x1xf32> to vector<8x128xf32>
    %66 = arith.mulf %65, %49 : vector<8x128xf32>
    %67 = arith.addf %40, %66 : vector<8x128xf32>
    %c2 = arith.constant 2 : index
    %c0_34 = arith.constant 0 : index
    %c0_35 = arith.constant 0 : index
    %68 = vector.load %arg0[%c2, %c0_34, %c0_35] : memref<3x8x32xf32, #tpu.memory_space<vmem>>, vector<1x8x32xf32>
    %69 = vector.shape_cast %68 : vector<1x8x32xf32> to vector<8x32xf32>
    %c2_36 = arith.constant 2 : index
    %c0_37 = arith.constant 0 : index
    %c0_38 = arith.constant 0 : index
    %70 = vector.load %arg1[%c2_36, %c0_37, %c0_38] : memref<3x32x128xf32, #tpu.memory_space<vmem>>, vector<1x32x128xf32>
    %71 = vector.shape_cast %70 : vector<1x32x128xf32> to vector<32x128xf32>
    %c2_39 = arith.constant 2 : index
    %c0_40 = arith.constant 0 : index
    %c0_41 = arith.constant 0 : index
    %72 = vector.load %arg2[%c2_39, %c0_40, %c0_41] : memref<3x1x128xf32, #tpu.memory_space<vmem>>, vector<1x1x128xf32>
    %73 = vector.shape_cast %72 : vector<1x1x128xf32> to vector<1x128xf32>
    %cst_42 = arith.constant dense<0.000000e+00> : vector<8x128xf32>
    %74 = tpu.matmul %69, %71, %cst_42 {dimension_numbers = #tpu.dot_dimension_numbers<[1], [0], [0], [1], [0, 0, 1, 1], [], []>} : vector<8x32xf32>, vector<32x128xf32>, vector<8x128xf32> -> vector<8x128xf32>
    %75 = vector.broadcast %73 : vector<1x128xf32> to vector<8x128xf32>
    %76 = arith.addf %74, %75 : vector<8x128xf32>
    %c2_43 = arith.constant 2 : index
    %c0_44 = arith.constant 0 : index
    %c0_45 = arith.constant 0 : index
    %77 = vector.load %arg4[%c2_43, %c0_44, %c0_45] : memref<3x8x128xf32, #tpu.memory_space<vmem>>, vector<1x8x128xf32>
    %78 = vector.shape_cast %77 : vector<1x8x128xf32> to vector<8x128xf32>
    %79 = vector.shape_cast %76 : vector<8x128xf32> to vector<1x8x128xf32>
    tpu.vector_store %arg4[%c2_43, %c0_44, %c0_45], %79 {strides = array<i32>} : memref<3x8x128xf32, #tpu.memory_space<vmem>>, vector<1x8x128xf32>,
    %cst_46 = arith.constant dense<0xFF800000> : vector<8xf32>
    %80 = vector.multi_reduction <maximumf>, %76, %cst_46 [1] : vector<8x128xf32> to vector<8xf32>
    %81 = vector.shape_cast %80 : vector<8xf32> to vector<8x1xf32>
    %82 = vector.broadcast %81 : vector<8x1xf32> to vector<8x128xf32>
    %83 = arith.subf %76, %82 : vector<8x128xf32>
    %84 = math.exp %83 : vector<8x128xf32>
    %cst_47 = arith.constant dense<0.000000e+00> : vector<8xf32>
    %85 = vector.multi_reduction <add>, %84, %cst_47 [1] : vector<8x128xf32> to vector<8xf32>
    %86 = vector.shape_cast %85 : vector<8xf32> to vector<8x1xf32>
    %87 = math.log %86 : vector<8x1xf32>
    %88 = vector.broadcast %87 : vector<8x1xf32> to vector<8x128xf32>
    %89 = arith.subf %83, %88 : vector<8x128xf32>
    %90 = arith.addf %63, %89 : vector<8x128xf32>
    %91 = vector.extract_strided_slice %11 {offsets = [0, 2], sizes = [8, 1], strides = [1, 1]} : vector<8x3xf32> to vector<8x1xf32>
    %92 = vector.broadcast %91 : vector<8x1xf32> to vector<8x128xf32>
    %93 = arith.mulf %92, %76 : vector<8x128xf32>
    %94 = arith.addf %67, %93 : vector<8x128xf32>
    %c0_48 = arith.constant 0 : index
    %c0_49 = arith.constant 0 : index
    %95 = vector.load %arg5[%c0_48, %c0_49] : memref<8x128xf32, #tpu.memory_space<vmem>>, vector<8x128xf32>
    tpu.vector_store %arg5[%c0_48, %c0_49], %94 {strides = array<i32>} : memref<8x128xf32, #tpu.memory_space<vmem>>, vector<8x128xf32>,
    %cst_50 = arith.constant dense<0xFF800000> : vector<8xf32>
    %96 = vector.multi_reduction <maximumf>, %90, %cst_50 [1] : vector<8x128xf32> to vector<8xf32>
    %97 = vector.shape_cast %96 : vector<8xf32> to vector<8x1xf32>
    %98 = tpu.iota {dimensions = array<i32: 1>} : vector<8x128xi32>
    %99 = vector.broadcast %97 : vector<8x1xf32> to vector<8x128xf32>
    %100 = arith.cmpf oge, %90, %99 : vector<8x128xf32>
    %c128_i32 = arith.constant 128 : i32
    %101 = vector.broadcast %c128_i32 : i32 to vector<8x128xi32>
    %102 = arith.select %100, %98, %101 : vector<8x128xi1>, vector<8x128xi32>
    %cst_51 = arith.constant dense<2147483647> : vector<8xi32>
    %103 = vector.multi_reduction <minsi>, %102, %cst_51 [1] : vector<8x128xi32> to vector<8xi32>
    %104 = vector.shape_cast %103 : vector<8xi32> to vector<8x1xi32>
    %c0_52 = arith.constant 0 : index
    %c0_53 = arith.constant 0 : index
    %105 = vector.load %arg6[%c0_52, %c0_53] : memref<8x1xi32, #tpu.memory_space<vmem>>, vector<8x1xi32>
    tpu.vector_store %arg6[%c0_52, %c0_53], %104 {strides = array<i32>} : memref<8x1xi32, #tpu.memory_space<vmem>>, vector<8x1xi32>,
    return
  }
}

</mosaic_0001>

<llo_original>
// kernel: tpu_custom_call.1
$region0: #{tpu_custom_call.1}
  #allocation0 [shape = 'u32[]', space=smem, size = 0x4, offset = 0x4, fixed_abs, tag = 'smem constant byte address 0x4 - core index']
  #allocation1 [shape = 'u32[72,128]{1,0:T(1,128)}', space=vmem, size = 0x9000, scoped, tag = 'internal scratch']
  %s0 = inlined_call_operand.hbm [shape: f32[3,8,32], index: 0, kind: input, shape index: {}]
  %s1 = inlined_call_operand.hbm [shape: f32[3,32,128], index: 1, kind: input, shape index: {}]
  %s2 = inlined_call_operand.vmem [shape: f32[3,1,128], index: 2, kind: input, shape index: {}]
  %s3 = inlined_call_operand.vmem [shape: f32[8,3], index: 3, kind: input, shape index: {}]
  %s4 = inlined_call_operand.hbm [shape: f32[3,8,128], index: 4, kind: output, shape index: {0}]
  %s5 = inlined_call_operand.hbm [shape: f32[8,128], index: 5, kind: output, shape index: {1}]
  %s6 = inlined_call_operand.vmem [shape: s32[8,1], index: 6, kind: output, shape index: {2}]
  %7 = xla_tuple %s4, %s5, %s6
  %s8 = sld [smem:[#allocation0]]
  $region50: #{tpu_custom_call.1} parent=0
    _
  %s10 = ssub.s32 1, %s8
  %s11 = scalar_select 0, %s10, %s8
  $region1: #{tpu_custom_call.1} parent=0
    #allocation2 [shape = 'u8[12288]{0}', space=vmem, size = 0x3000, scoped, tag = 'input window, operand 0, single buffered']
    #allocation3 [shape = 's32[1]{0}', space=sflag, size = 0x4, scoped, tag = 'scoped memory for tpu_custom_call.1']
    #allocation4 [shape = 's32[1]{0}', space=sflag, size = 0x4, scoped, tag = 'scoped memory for tpu_custom_call.1']
    #allocation5 [shape = 'u8[49152]{0}', space=vmem, size = 0xc000, scoped, tag = 'input window, operand 1, single buffered']
    #allocation6 [shape = 's32[1]{0}', space=sflag, size = 0x4, scoped, tag = 'scoped memory for tpu_custom_call.1']
    #allocation7 [shape = 'u8[12288]{0}', space=vmem, size = 0x3000, scoped, tag = 'output window, operand 0, single buffered']
    #allocation8 [shape = 'u8[4096]{0}', space=vmem, size = 0x1000, scoped, tag = 'output window, operand 1, single buffered']
    #allocation9 [shape = 's32[1]{0}', space=sflag, size = 0x4, scoped, tag = 'scoped memory for tpu_custom_call.1']
    %12 = vsyncpa [#allocation3], 0
    %13 = vsyncpa [#allocation6], 0
    %14 = vsyncpa [#allocation4], 0
    %15 = vsyncpa [#allocation9], 0
    // Predicated region
    $region2: #{tpu_custom_call.1} parent=1 // pred_check
      _
    $region3: #{tpu_custom_call.1} parent=1 // pred_check_branch
      %17 = sbr.rel (0) target = $region5
    $region4: #{tpu_custom_call.1} parent=1 // pred_region
      %19 = vsyncadd [#allocation3], 0
      %s20 = sshll.u32 %s0, 4
      %s21 = int_to_ptr.hbm [resolvable:$true] %s20
      %s22 = sshll.u32 [#allocation2], 4
      %s23 = int_to_ptr.vmem [resolvable:$true] %s22
      %28 = dma.hbm_to_vmem [thread:$0]  %s21, 384, %s23, [#allocation3], 128, 128, 8
    $region5: #{tpu_custom_call.1} parent=1 // pred_fallthru
      _
    // Predicated region
    $region6: #{tpu_custom_call.1} parent=1 // pred_check
      _
    $region7: #{tpu_custom_call.1} parent=1 // pred_check_branch
      %30 = sbr.rel (0) target = $region9
    $region8: #{tpu_custom_call.1} parent=1 // pred_region
      %32 = vsyncadd [#allocation6], 0
      %s33 = sshll.u32 %s1, 4
      %s34 = int_to_ptr.hbm [resolvable:$true] %s33
      %s35 = sshll.u32 [#allocation5], 4
      %s36 = int_to_ptr.vmem [resolvable:$true] %s35
      %41 = dma.hbm_to_vmem [thread:$0]  %s34, 1536, %s36, [#allocation6], 128, 128, 8
    $region9: #{tpu_custom_call.1} parent=1 // pred_fallthru
      _
    // Predicated region
    $region10: #{tpu_custom_call.1} parent=1 // pred_check
      _
    $region11: #{tpu_custom_call.1} parent=1 // pred_check_branch
      %43 = sbr.rel (0) target = $region13
    $region12: #{tpu_custom_call.1} parent=1 // pred_region
      _
    $region13: #{tpu_custom_call.1} parent=1 // pred_fallthru
      _
    // Predicated region
    $region14: #{tpu_custom_call.1} parent=1 // pred_check
      _
    $region15: #{tpu_custom_call.1} parent=1 // pred_check_branch
      %45 = sbr.rel (0) target = $region17
    $region16: #{tpu_custom_call.1} parent=1 // pred_region
      _
    $region17: #{tpu_custom_call.1} parent=1 // pred_fallthru
      _
    // Predicated region
    $region18: #{tpu_custom_call.1} parent=1 // pred_check
      _
    $region19: #{tpu_custom_call.1} parent=1 // pred_check_branch
      %47 = sbr.rel (0) target = $region21
    $region20: #{tpu_custom_call.1} parent=1 // pred_region
      %49 = dma.done [#allocation3], 384
    $region21: #{tpu_custom_call.1} parent=1 // pred_fallthru
      _
    // Predicated region
    $region22: #{tpu_custom_call.1} parent=1 // pred_check
      _
    $region23: #{tpu_custom_call.1} parent=1 // pred_check_branch
      %51 = sbr.rel (0) target = $region25
    $region24: #{tpu_custom_call.1} parent=1 // pred_region
      %53 = dma.done [#allocation6], 1536
    $region25: #{tpu_custom_call.1} parent=1 // pred_fallthru
      _
    %v54 = vld [vmem:[%s3] sm:$0xff]
    %v55 = vmul.f32 %v54, 3.3333333
    %vm56 = vcmask 23552
    %v57 = vsel %vm56, %v55, -inf
    %58 = vmax.xlane.f32.xlu0 %v57
    %v59 = vpop.xlane.xlu0 %58
    %v60 = vsub.f32 %v55, %v59
    %v61 = vmul.f32 %v60, 1.442695
    %v62 = vpow.pop %v61
    %v63 = vsel %vm56, %v62, 0.0
    %64 = vadd.xlane.f32.xlu0 %v63
    %v65 = vpop.xlane.xlu0 %64
    %v66 = vrcp.pop %v65
    %v67 = vmul.f32 %v65, %v66
    %v68 = vsub.f32 1.0, %v67
    %v69 = vmul.f32 %v66, %v68
    %v70 = vadd.f32 %v66, %v69
    %vm71 = vweird.f32 %v65
    %vm72 = vweird.f32 %v66
    %vm73 = vmor %vm71, %vm72
    %v74 = vsel %vm73, %v66, %v70
    %v75 = vand.u32 2147483647, %v65
    %vm76 = vcmp.eq.f32.partialorder %v75, 8.507059e+37
    %v77 = vand.u32 %v65, 2147483648
    %v78 = vor.u32 1.1754944e-38, %v77
    %v79 = vsel %vm76, %v78, %v74
    %v80 = vmul.f32 %v62, %v79
    %v81 = vld [vmem:[#allocation2] sm:$0xff]
    %v82 = vld [vmem:[#allocation5] sm:$0xff]
    %v83 = vld [vmem:[#allocation5 + $0x8] sm:$0xff]
    %v84 = vld [vmem:[#allocation5 + $0x10] sm:$0xff]
    %v85 = vld [vmem:[#allocation5 + $0x18] sm:$0xff]
    %v86 = vld [vmem:[%s2] sm:$0x1]
    %v88 = vperm.slane %v86, 0
    %vm90 = vcmask 261120
    %v92 = vsel %vm90, %v81, 0
    %94 = vmatpush.msra.mxu0 0.0
    %95 = vmatpush.msra.mxu0 0.0
    %96 = vmatpush.msra.mxu0 0.0
    %97 = vmatpush.msra.mxu0 0.0
    %98 = vmatpush.msra.mxu0 0.0
    %99 = vmatpush.msra.mxu0 0.0
    %100 = vmatpush.msra.mxu0 0.0
    %101 = vmatpush.msra.mxu0 0.0
    %102 = vmatpush.msra.mxu0 0.0
    %103 = vmatpush.msra.mxu0 0.0
    %104 = vmatpush.msra.mxu0 0.0
    %105 = vmatpush.msra.mxu0 0.0
    %106 = vmatpush.msra.mxu0 %v85
    %107 = vmatpush.msra.mxu0 %v84
    %108 = vmatpush.msra.mxu0 %v83
    %109 = vmatpush.msra.mxu0 %v82
    %110 = vmatmul.f32.gmra.mxu0 %v92
    %v111 = vpop.f32.mrf.mxu0
    %v112 = vadd.f32 %v88, %v111
    %113 = vdwg.mxu0
    %114 = vst [vmem:[#allocation7] sm:$0xff] %v112
    %115 = vmax.xlane.f32.xlu0 %v112
    %v116 = vpop.xlane.xlu0 %115
    %v117 = vsub.f32 %v112, %v116
    %v118 = vmul.f32 %v117, 1.442695
    %v119 = vpow.pop %v118
    %120 = vadd.xlane.f32.xlu0 %v119
    %v121 = vpop.xlane.xlu0 %120
    %v122 = vlog2.pop %v121
    %v123 = vmul.f32 %v122, 0.6931472
    %v124 = vsub.f32 %v117, %v123
    %v125 = vadd.f32 %v124, 0.0
    %127 = vset.pattern.permute.xlu0 0
    %128 = vperm.xlu0 %127, %v80
    %v129 = vpop.permute.xlu0 %128
    %v131 = vmul.f32 %v129, %v112
    %v132 = vadd.f32 %v131, 0.0
    %s133 = scalar_lea.vmem [#allocation2], 8
    %v134 = vld [vmem:[%s133] sm:$0xff]
    %s135 = scalar_lea.vmem [#allocation5], 32
    %v136 = vld [vmem:[%s135] sm:$0xff]
    %v137 = vld [vmem:[%s135 + $0x8] sm:$0xff]
    %v138 = vld [vmem:[%s135 + $0x10] sm:$0xff]
    %v139 = vld [vmem:[%s135 + $0x18] sm:$0xff]
    %s140 = scalar_lea.vmem %s2, 1
    %v141 = vld [vmem:[%s140] sm:$0x1]
    %v143 = vperm.slane %v141, 0
    %v146 = vsel %vm90, %v134, 0
    %148 = vmatpush.msra.mxu0 0.0
    %149 = vmatpush.msra.mxu0 0.0
    %150 = vmatpush.msra.mxu0 0.0
    %151 = vmatpush.msra.mxu0 0.0
    %152 = vmatpush.msra.mxu0 0.0
    %153 = vmatpush.msra.mxu0 0.0
    %154 = vmatpush.msra.mxu0 0.0
    %155 = vmatpush.msra.mxu0 0.0
    %156 = vmatpush.msra.mxu0 0.0
    %157 = vmatpush.msra.mxu0 0.0
    %158 = vmatpush.msra.mxu0 0.0
    %159 = vmatpush.msra.mxu0 0.0
    %160 = vmatpush.msra.mxu0 %v139
    %161 = vmatpush.msra.mxu0 %v138
    %162 = vmatpush.msra.mxu0 %v137
    %163 = vmatpush.msra.mxu0 %v136
    %164 = vmatmul.f32.gmra.mxu0 %v146
    %v165 = vpop.f32.mrf.mxu0
    %v166 = vadd.f32 %v143, %v165
    %167 = vdwg.mxu0
    %s168 = scalar_lea.vmem [#allocation7], 8
    %169 = vst [vmem:[%s168] sm:$0xff] %v166
    %170 = vmax.xlane.f32.xlu0 %v166
    %v171 = vpop.xlane.xlu0 %170
    %v172 = vsub.f32 %v166, %v171
    %v173 = vmul.f32 %v172, 1.442695
    %v174 = vpow.pop %v173
    %175 = vadd.xlane.f32.xlu0 %v174
    %v176 = vpop.xlane.xlu0 %175
    %v177 = vlog2.pop %v176
    %v178 = vmul.f32 %v177, 0.6931472
    %v179 = vsub.f32 %v172, %v178
    %v180 = vadd.f32 %v125, %v179
    %181 = vset.pattern.permute.xlu0 1
    %182 = vperm.xlu0 %181, %v80
    %v183 = vpop.permute.xlu0 %182
    %v185 = vmul.f32 %v183, %v166
    %v186 = vadd.f32 %v132, %v185
    %s187 = scalar_lea.vmem [#allocation2], 16
    %v188 = vld [vmem:[%s187] sm:$0xff]
    %s189 = scalar_lea.vmem [#allocation5], 64
    %v190 = vld [vmem:[%s189] sm:$0xff]
    %v191 = vld [vmem:[%s189 + $0x8] sm:$0xff]
    %v192 = vld [vmem:[%s189 + $0x10] sm:$0xff]
    %v193 = vld [vmem:[%s189 + $0x18] sm:$0xff]
    %s194 = scalar_lea.vmem %s2, 2
    %v195 = vld [vmem:[%s194] sm:$0x1]
    %v197 = vperm.slane %v195, 0
    %v200 = vsel %vm90, %v188, 0
    %202 = vmatpush.msra.mxu0 0.0
    %203 = vmatpush.msra.mxu0 0.0
    %204 = vmatpush.msra.mxu0 0.0
    %205 = vmatpush.msra.mxu0 0.0
    %206 = vmatpush.msra.mxu0 0.0
    %207 = vmatpush.msra.mxu0 0.0
    %208 = vmatpush.msra.mxu0 0.0
    %209 = vmatpush.msra.mxu0 0.0
    %210 = vmatpush.msra.mxu0 0.0
    %211 = vmatpush.msra.mxu0 0.0
    %212 = vmatpush.msra.mxu0 0.0
    %213 = vmatpush.msra.mxu0 0.0
    %214 = vmatpush.msra.mxu0 %v193
    %215 = vmatpush.msra.mxu0 %v192
    %216 = vmatpush.msra.mxu0 %v191
    %217 = vmatpush.msra.mxu0 %v190
    %218 = vmatmul.f32.gmra.mxu0 %v200
    %v219 = vpop.f32.mrf.mxu0
    %v220 = vadd.f32 %v197, %v219
    %221 = vdwg.mxu0
    %s222 = scalar_lea.vmem [#allocation7], 16
    %223 = vst [vmem:[%s222] sm:$0xff] %v220
    %224 = vmax.xlane.f32.xlu0 %v220
    %v225 = vpop.xlane.xlu0 %224
    %v226 = vsub.f32 %v220, %v225
    %v227 = vmul.f32 %v226, 1.442695
    %v228 = vpow.pop %v227
    %229 = vadd.xlane.f32.xlu0 %v228
    %v230 = vpop.xlane.xlu0 %229
    %v231 = vlog2.pop %v230
    %v232 = vmul.f32 %v231, 0.6931472
    %v233 = vsub.f32 %v226, %v232
    %v234 = vadd.f32 %v180, %v233
    %235 = vset.pattern.permute.xlu0 2
    %236 = vperm.xlu0 %235, %v80
    %v237 = vpop.permute.xlu0 %236
    %v239 = vmul.f32 %v237, %v220
    %v240 = vadd.f32 %v186, %v239
    %241 = vst [vmem:[#allocation8] sm:$0xff] %v240
    %242 = vmax.xlane.f32.xlu0 %v234
    %v243 = vpop.xlane.xlu0 %242
    %v244 = vlaneseq
    %v245 = vand.u32 %v244, 127
    %vm246 = vcmp.ge.f32.partialorder %v234, %v243
    %v247 = vsel %vm246, %v245, 128
    %v248 = vand.u32 %v247, 65535
    %v249 = vshra.s32 %v247, 16
    %v250 = vcvt.s32.f32 %v248
    %v251 = vcvt.s32.f32 %v249
    %252 = vmin.xlane.f32.xlu0 %v251
    %v253 = vpop.xlane.xlu0 %252
    %vm254 = vcmp.eq.f32.partialorder %v251, %v253
    %v255 = vsel %vm254, %v250, inf
    %256 = vmin.xlane.f32.xlu0 %v255
    %v257 = vpop.xlane.xlu0 %256
    %v258 = vcvt.f32.s32 %v257
    %v259 = vcvt.f32.s32 %v253
    %v260 = vshll.u32 %v259, 16
    %v261 = vadd.s32 %v260, %v258
    %vm262 = vcmask 7168
    %263 = vst.msk [vmem:[%s6] sm:$0xff] %vm262, %v261
    // Predicated region
    $region26: #{tpu_custom_call.1} parent=1 // pred_check
      _
    $region27: #{tpu_custom_call.1} parent=1 // pred_check_branch
      %265 = sbr.rel (0) target = $region29
    $region28: #{tpu_custom_call.1} parent=1 // pred_region
      %267 = vsyncadd [#allocation4], 0
      %s268 = sshll.u32 [#allocation7], 4
      %s269 = int_to_ptr.vmem [resolvable:$true] %s268
      %s270 = sshll.u32 %s4, 4
      %s271 = int_to_ptr.hbm [resolvable:$true] %s270
      %276 = dma.vmem_to_hbm [thread:$0]  %s269, 384, %s271, [#allocation4], 128, 128, 8
    $region29: #{tpu_custom_call.1} parent=1 // pred_fallthru
      _
    // Predicated region
    $region30: #{tpu_custom_call.1} parent=1 // pred_check
      _
    $region31: #{tpu_custom_call.1} parent=1 // pred_check_branch
      %278 = sbr.rel (0) target = $region33
    $region32: #{tpu_custom_call.1} parent=1 // pred_region
      %280 = vsyncadd [#allocation9], 0
      %s282 = sshll.u32 [#allocation8], 4
      %s283 = int_to_ptr.vmem [resolvable:$true] %s282
      %s284 = sshll.u32 %s5, 4
      %s285 = int_to_ptr.hbm [resolvable:$true] %s284
      %287 = dma.vmem_to_hbm [thread:$0]  %s283, 128, %s285, [#allocation9]
    $region33: #{tpu_custom_call.1} parent=1 // pred_fallthru
      _
    // Predicated region
    $region34: #{tpu_custom_call.1} parent=1 // pred_check
      _
    $region35: #{tpu_custom_call.1} parent=1 // pred_check_branch
      %289 = sbr.rel (0) target = $region37
    $region36: #{tpu_custom_call.1} parent=1 // pred_region
      _
    $region37: #{tpu_custom_call.1} parent=1 // pred_fallthru
      _
    // Predicated region
    $region38: #{tpu_custom_call.1} parent=1 // pred_check
      _
    $region39: #{tpu_custom_call.1} parent=1 // pred_check_branch
      %291 = sbr.rel (0) target = $region41
    $region40: #{tpu_custom_call.1} parent=1 // pred_region
      %293 = dma.done [#allocation4], 384
    $region41: #{tpu_custom_call.1} parent=1 // pred_fallthru
      _
    // Predicated region
    $region42: #{tpu_custom_call.1} parent=1 // pred_check
      _
    $region43: #{tpu_custom_call.1} parent=1 // pred_check_branch
      %295 = sbr.rel (0) target = $region45
    $region44: #{tpu_custom_call.1} parent=1 // pred_region
      %297 = dma.done [#allocation9], 128
    $region45: #{tpu_custom_call.1} parent=1 // pred_fallthru
      _
    // Predicated region
    $region46: #{tpu_custom_call.1} parent=1 // pred_check
      _
    $region47: #{tpu_custom_call.1} parent=1 // pred_check_branch
      %299 = sbr.rel (0) target = $region49
    $region48: #{tpu_custom_call.1} parent=1 // pred_region
      _
    $region49: #{tpu_custom_call.1} parent=1 // pred_fallthru
      _
    %300 = vsyncpa [#allocation3], 1
    %301 = vsyncpa [#allocation6], 1
    %302 = vsyncpa [#allocation4], 1
    %303 = vsyncpa [#allocation9], 1

</llo_original>
